<compile_context>
chip_gen: v7x
topology: tpu7x:2x2x1
jax: 0.10.0
libtpu: 0.0.40
codegen_flags: <defaults>
</compile_context>

<pallas_src>
import functools

import jax
import jax.numpy as jnp
from jax.experimental import pallas as pl
from jax.experimental.pallas import tpu as pltpu

HIDDEN_SIZE = 32
_LANE = 128


def _round_up(x, m):
    return ((x + m - 1) // m) * m


def _agent_mlp_kernel(x_ref, w1_ref, b1_ref, w2_ref, b2_ref, w3_ref, b3_ref,
                      out_ref):
    """Fused fc1 -> relu -> mlp -> relu -> fc2 on one (feature, batch) tile.

    x_ref  : (in_feature, blk)          -- batch on lanes
    w*_ref : PyTorch layout (out, in)
    b*_ref : (out, 1) columns (broadcast over the batch lanes)
    out_ref: (out_feature, blk)
    """
    mm_dtype = w1_ref.dtype            # f32 or bf16 (set by the wrapper)
    x = x_ref[...]

    # fc1 + ReLU          (hidden, blk)
    h1 = jnp.dot(w1_ref[...], x, preferred_element_type=jnp.float32)
    h1 = jnp.maximum(h1 + b1_ref[...], 0.0).astype(mm_dtype)

    # mlp + ReLU          (hidden, blk)
    h2 = jnp.dot(w2_ref[...], h1, preferred_element_type=jnp.float32)
    h2 = jnp.maximum(h2 + b2_ref[...], 0.0).astype(mm_dtype)

    # fc2 (no activation) (out_feature, blk)
    out = jnp.dot(w3_ref[...], h2, preferred_element_type=jnp.float32)
    out_ref[...] = (out + b3_ref[...]).astype(out_ref.dtype)


@functools.partial(jax.jit, static_argnames=("block_b", "matmul_dtype"))
def agent_forward(obs, w1, b1, w2, b2, w3, b3, *, block_b=2048,
                  matmul_dtype=None):
    """obs: (B, in_feature) -> (B, out_feature).

    Weights are in PyTorch layout: w* is (out_features, in_features),
    b* is (out_features, 1).
    """
    assert block_b % _LANE == 0, "block_b must be a multiple of 128"
    B, in_feature = obs.shape
    hidden = w1.shape[0]
    out_feature = w3.shape[0]
    out_dtype = obs.dtype

    # --- choose the batch tile -------------------------------------------
    b_pad = _round_up(B, _LANE)
    if b_pad <= block_b:
        # Whole batch fits in one block.  If there is enough work, still split
        # into 2 parallel grid steps so both TensorCores are used on v7x.
        blk = _round_up(-(-b_pad // 2), _LANE) if b_pad >= 2 * _LANE else b_pad
    else:
        blk = block_b
    B_padded = _round_up(B, blk)
    grid = (B_padded // blk,)

    # --- layout plumbing in the wrapper (not per-step in the kernel) ------
    x_t = jnp.transpose(obs)                               # (in_feature, B)
    x_t = jnp.pad(x_t, ((0, 0), (0, B_padded - B)))        # lane-align batch

    if matmul_dtype is not None:
        x_t = x_t.astype(matmul_dtype)
        w1c, w2c, w3c = (w.astype(matmul_dtype) for w in (w1, w2, w3))
    else:
        w1c, w2c, w3c = w1, w2, w3

    flops = 2 * B_padded * (in_feature * hidden
                            + hidden * hidden
                            + hidden * out_feature)
    bytes_accessed = int(
        x_t.size * x_t.dtype.itemsize
        + out_feature * B_padded * jnp.dtype(out_dtype).itemsize
        + sum(a.size * a.dtype.itemsize for a in (w1c, b1, w2c, b2, w3c, b3)))

    out_t = pl.pallas_call(
        _agent_mlp_kernel,
        out_shape=jax.ShapeDtypeStruct((out_feature, B_padded), out_dtype),
        grid_spec=pltpu.PrefetchScalarGridSpec(
            num_scalar_prefetch=0,
            grid=grid,
            in_specs=[
                # activations: one lane-dense batch block per grid step
                pl.BlockSpec((in_feature, blk), lambda i: (0, i)),
                # weights / biases: tiny, resident for every block
                pl.BlockSpec((hidden, in_feature), lambda i: (0, 0)),
                pl.BlockSpec((hidden, 1), lambda i: (0, 0)),
                pl.BlockSpec((hidden, hidden), lambda i: (0, 0)),
                pl.BlockSpec((hidden, 1), lambda i: (0, 0)),
                pl.BlockSpec((out_feature, hidden), lambda i: (0, 0)),
                pl.BlockSpec((out_feature, 1), lambda i: (0, 0)),
            ],
            out_specs=pl.BlockSpec((out_feature, blk), lambda i: (0, i)),
        ),
        compiler_params=pltpu.CompilerParams(
            dimension_semantics=("parallel",)),
        cost_estimate=pl.CostEstimate(flops=flops, transcendentals=0,
                                      bytes_accessed=bytes_accessed),
    )(x_t, w1c, b1, w2c, b2, w3c, b3)

    return jnp.transpose(out_t[:, :B])                     # (B, out_feature)


def init_agent_params(key, in_feature, out_feature, hidden=HIDDEN_SIZE,
                      dtype=jnp.float32):
    """Deterministic init mimicking nn.Linear default, PyTorch (out, in) layout."""
    ks = jax.random.split(key, 6)

    def linear(kw, kb, fan_in, fan_out):
        bound = 1.0 / jnp.sqrt(fan_in)
        w = jax.random.uniform(kw, (fan_out, fan_in), dtype, -bound, bound)
        b = jax.random.uniform(kb, (fan_out, 1), dtype, -bound, bound)
        return w, b

    w1, b1 = linear(ks[0], ks[1], in_feature, hidden)
    w2, b2 = linear(ks[2], ks[3], hidden, hidden)
    w3, b3 = linear(ks[4], ks[5], hidden, out_feature)
    return w1, b1, w2, b2, w3, b3


def agent_forward_ref(obs, w1, b1, w2, b2, w3, b3):
    """Pure-JAX reference matching the PyTorch forward (weights are (out, in))."""
    x1 = jax.nn.relu(obs @ w1.T + b1.T)
    x2 = jax.nn.relu(x1 @ w2.T + b2.T)
    return x2 @ w3.T + b3.T


if __name__ == "__main__":
    key = jax.random.PRNGKey(0)
    k_obs, k_param = jax.random.split(key)

    in_feature = 16    # observation + action (+ one-hot) features
    out_feature = 4
    params = init_agent_params(k_param, in_feature, out_feature)

    # Small ragged batch (exercises pad-to-128, single grid step).
    obs = jax.random.normal(k_obs, (8, in_feature), dtype=jnp.float32)
    out = jax.block_until_ready(agent_forward(obs, *params))
    ref = agent_forward_ref(obs, *params)
    assert out.shape == (8, out_feature)
    assert jnp.allclose(out, ref, atol=1e-5, rtol=1e-5), "f32 mismatch (B=8)"

    # Ragged batch that doesn't divide the block -> 2 parallel grid steps.
    obs2 = jax.random.normal(k_obs, (260, in_feature), dtype=jnp.float32)
    out2 = jax.block_until_ready(agent_forward(obs2, *params))
    ref2 = agent_forward_ref(obs2, *params)
    assert out2.shape == (260, out_feature)
    assert jnp.allclose(out2, ref2, atol=1e-5, rtol=1e-5), "f32 mismatch (B=260)"

    # bf16 MXU path (v6e/v7x); accumulation / bias / ReLU stay f32.
    out_bf16 = jax.block_until_ready(
        agent_forward(obs2, *params, matmul_dtype=jnp.bfloat16))
    assert jnp.allclose(out_bf16, ref2, atol=5e-2, rtol=5e-2), "bf16 mismatch"

    print("KERNEL_OK")
</pallas_src>

<mosaic_0001>
module attributes {stable_mosaic.version = 11 : i64} {
  func.func @_agent_mlp_kernel(%arg0: i32, %arg1: memref<16x128xf32, #tpu.memory_space<vmem>>, %arg2: memref<32x16xf32, #tpu.memory_space<vmem>>, %arg3: memref<32x1xf32, #tpu.memory_space<vmem>>, %arg4: memref<32x32xf32, #tpu.memory_space<vmem>>, %arg5: memref<32x1xf32, #tpu.memory_space<vmem>>, %arg6: memref<4x32xf32, #tpu.memory_space<vmem>>, %arg7: memref<4x1xf32, #tpu.memory_space<vmem>>, %arg8: memref<4x128xf32, #tpu.memory_space<vmem>>) attributes {dimension_semantics = [#tpu.dimension_semantics<parallel>], iteration_bounds = array<i64: 1>, scalar_prefetch = 0 : i64, scratch_operands = 0 : i64, tpu.core_type = #tpu.core_type<tc>, window_params = [{transform_indices = @transform_0, window_bounds = array<i64: 16, 128>}, {pipeline_mode = #tpu.pipeline_mode<synchronous>, transform_indices = @transform_1, window_bounds = array<i64: 32, 16>}, {pipeline_mode = #tpu.pipeline_mode<synchronous>, transform_indices = @transform_2, window_bounds = array<i64: 32, 1>}, {pipeline_mode = #tpu.pipeline_mode<synchronous>, transform_indices = @transform_3, window_bounds = array<i64: 32, 32>}, {pipeline_mode = #tpu.pipeline_mode<synchronous>, transform_indices = @transform_4, window_bounds = array<i64: 32, 1>}, {pipeline_mode = #tpu.pipeline_mode<synchronous>, transform_indices = @transform_5, window_bounds = array<i64: 4, 32>}, {pipeline_mode = #tpu.pipeline_mode<synchronous>, transform_indices = @transform_6, window_bounds = array<i64: 4, 1>}, {transform_indices = @transform_7, window_bounds = array<i64: 4, 128>}]} {
    %c0 = arith.constant 0 : index
    %c0_0 = arith.constant 0 : index
    %0 = vector.load %arg1[%c0, %c0_0] : memref<16x128xf32, #tpu.memory_space<vmem>>, vector<16x128xf32>
    %c0_1 = arith.constant 0 : index
    %c0_2 = arith.constant 0 : index
    %1 = vector.load %arg2[%c0_1, %c0_2] : memref<32x16xf32, #tpu.memory_space<vmem>>, vector<32x16xf32>
    %cst = arith.constant dense<0.000000e+00> : vector<32x128xf32>
    %2 = tpu.matmul %1, %0, %cst {dimension_numbers = #tpu.dot_dimension_numbers<[1], [0], [0], [1], [0, 0, 1, 1], [], []>} : vector<32x16xf32>, vector<16x128xf32>, vector<32x128xf32> -> vector<32x128xf32>
    %c0_3 = arith.constant 0 : index
    %c0_4 = arith.constant 0 : index
    %3 = vector.load %arg3[%c0_3, %c0_4] : memref<32x1xf32, #tpu.memory_space<vmem>>, vector<32x1xf32>
    %4 = vector.broadcast %3 : vector<32x1xf32> to vector<32x128xf32>
    %5 = arith.addf %2, %4 : vector<32x128xf32>
    %cst_5 = arith.constant 0.000000e+00 : f32
    %6 = vector.broadcast %cst_5 : f32 to vector<32x128xf32>
    %7 = arith.maximumf %5, %6 : vector<32x128xf32>
    %c0_6 = arith.constant 0 : index
    %c0_7 = arith.constant 0 : index
    %8 = vector.load %arg4[%c0_6, %c0_7] : memref<32x32xf32, #tpu.memory_space<vmem>>, vector<32x32xf32>
    %cst_8 = arith.constant dense<0.000000e+00> : vector<32x128xf32>
    %9 = tpu.matmul %8, %7, %cst_8 {dimension_numbers = #tpu.dot_dimension_numbers<[1], [0], [0], [1], [0, 0, 1, 1], [], []>} : vector<32x32xf32>, vector<32x128xf32>, vector<32x128xf32> -> vector<32x128xf32>
    %c0_9 = arith.constant 0 : index
    %c0_10 = arith.constant 0 : index
    %10 = vector.load %arg5[%c0_9, %c0_10] : memref<32x1xf32, #tpu.memory_space<vmem>>, vector<32x1xf32>
    %11 = vector.broadcast %10 : vector<32x1xf32> to vector<32x128xf32>
    %12 = arith.addf %9, %11 : vector<32x128xf32>
    %cst_11 = arith.constant 0.000000e+00 : f32
    %13 = vector.broadcast %cst_11 : f32 to vector<32x128xf32>
    %14 = arith.maximumf %12, %13 : vector<32x128xf32>
    %c0_12 = arith.constant 0 : index
    %c0_13 = arith.constant 0 : index
    %15 = vector.load %arg6[%c0_12, %c0_13] : memref<4x32xf32, #tpu.memory_space<vmem>>, vector<4x32xf32>
    %cst_14 = arith.constant dense<0.000000e+00> : vector<4x128xf32>
    %16 = tpu.matmul %15, %14, %cst_14 {dimension_numbers = #tpu.dot_dimension_numbers<[1], [0], [0], [1], [0, 0, 1, 1], [], []>} : vector<4x32xf32>, vector<32x128xf32>, vector<4x128xf32> -> vector<4x128xf32>
    %c0_15 = arith.constant 0 : index
    %c0_16 = arith.constant 0 : index
    %17 = vector.load %arg7[%c0_15, %c0_16] : memref<4x1xf32, #tpu.memory_space<vmem>>, vector<4x1xf32>
    %18 = vector.broadcast %17 : vector<4x1xf32> to vector<4x128xf32>
    %19 = arith.addf %16, %18 : vector<4x128xf32>
    %c0_17 = arith.constant 0 : index
    %c0_18 = arith.constant 0 : index
    %20 = vector.load %arg8[%c0_17, %c0_18] : memref<4x128xf32, #tpu.memory_space<vmem>>, vector<4x128xf32>
    tpu.vector_store %arg8[%c0_17, %c0_18], %19 {strides = array<i32>} : memref<4x128xf32, #tpu.memory_space<vmem>>, vector<4x128xf32>,
    return
  }
  func.func @transform_0(%arg0: i32) -> (i32, i32) {
    %c0_i32 = arith.constant 0 : i32
    %c0_i32_0 = arith.constant 0 : i32
    return %c0_i32, %arg0 : i32, i32
  }
  func.func @transform_1(%arg0: i32) -> (i32, i32) {
    %c0_i32 = arith.constant 0 : i32
    %c0_i32_0 = arith.constant 0 : i32
    %c0_i32_1 = arith.constant 0 : i32
    return %c0_i32, %c0_i32_0 : i32, i32
  }
  func.func @transform_2(%arg0: i32) -> (i32, i32) {
    %c0_i32 = arith.constant 0 : i32
    %c0_i32_0 = arith.constant 0 : i32
    %c0_i32_1 = arith.constant 0 : i32
    return %c0_i32, %c0_i32_0 : i32, i32
  }
  func.func @transform_3(%arg0: i32) -> (i32, i32) {
    %c0_i32 = arith.constant 0 : i32
    %c0_i32_0 = arith.constant 0 : i32
    %c0_i32_1 = arith.constant 0 : i32
    return %c0_i32, %c0_i32_0 : i32, i32
  }
  func.func @transform_4(%arg0: i32) -> (i32, i32) {
    %c0_i32 = arith.constant 0 : i32
    %c0_i32_0 = arith.constant 0 : i32
    %c0_i32_1 = arith.constant 0 : i32
    return %c0_i32, %c0_i32_0 : i32, i32
  }
  func.func @transform_5(%arg0: i32) -> (i32, i32) {
    %c0_i32 = arith.constant 0 : i32
    %c0_i32_0 = arith.constant 0 : i32
    %c0_i32_1 = arith.constant 0 : i32
    return %c0_i32, %c0_i32_0 : i32, i32
  }
  func.func @transform_6(%arg0: i32) -> (i32, i32) {
    %c0_i32 = arith.constant 0 : i32
    %c0_i32_0 = arith.constant 0 : i32
    %c0_i32_1 = arith.constant 0 : i32
    return %c0_i32, %c0_i32_0 : i32, i32
  }
  func.func @transform_7(%arg0: i32) -> (i32, i32) {
    %c0_i32 = arith.constant 0 : i32
    %c0_i32_0 = arith.constant 0 : i32
    return %c0_i32, %arg0 : i32, i32
  }
}

</mosaic_0001>

<llo_original>
// kernel: agent_forward.1
$region0: #{agent_forward.1}
  #allocation0 [shape = 'u32[]', space=smem, size = 0x4, offset = 0x4, fixed_abs, tag = 'smem constant byte address 0x4 - core index']
  #allocation1 [shape = 'u32[144,128]{1,0:T(1,128)}', space=vmem, size = 0x12000, scoped, tag = 'internal scratch']
  %s0 = inlined_call_operand.vmem [shape: f32[16,128], index: 0, kind: input, shape index: {}]
  %s1 = inlined_call_operand.vmem [shape: f32[32,16], index: 1, kind: input, shape index: {}]
  %s2 = inlined_call_operand.vmem [shape: f32[32,1], index: 2, kind: input, shape index: {}]
  %s3 = inlined_call_operand.vmem [shape: f32[32,32], index: 3, kind: input, shape index: {}]
  %s4 = inlined_call_operand.vmem [shape: f32[32,1], index: 4, kind: input, shape index: {}]
  %s5 = inlined_call_operand.vmem [shape: f32[4,32], index: 5, kind: input, shape index: {}]
  %s6 = inlined_call_operand.vmem [shape: f32[4,1], index: 6, kind: input, shape index: {}]
  %s7 = inlined_call_operand.vmem [shape: f32[4,128], index: 7, kind: output, shape index: {}]
  %s8 = sld [smem:[#allocation0]]
  $region38: #{agent_forward.1} parent=0
    _
  %s10 = ssub.s32 1, %s8
  %s11 = scalar_select 0, %s10, %s8
  // Predicated region
  $region2: #{agent_forward.1} parent=0 // pred_check
    _
  $region3: #{agent_forward.1} parent=0 // pred_check_branch
    %13 = sbr.rel (0) target = $region5
  $region4: #{agent_forward.1} parent=0 // pred_region
    _
  $region5: #{agent_forward.1} parent=0 // pred_fallthru
    _
  // Predicated region
  $region6: #{agent_forward.1} parent=0 // pred_check
    _
  $region7: #{agent_forward.1} parent=0 // pred_check_branch
    %15 = sbr.rel (0) target = $region9
  $region8: #{agent_forward.1} parent=0 // pred_region
    _
  $region9: #{agent_forward.1} parent=0 // pred_fallthru
    _
  // Predicated region
  $region10: #{agent_forward.1} parent=0 // pred_check
    _
  $region11: #{agent_forward.1} parent=0 // pred_check_branch
    %17 = sbr.rel (0) target = $region13
  $region12: #{agent_forward.1} parent=0 // pred_region
    _
  $region13: #{agent_forward.1} parent=0 // pred_fallthru
    _
  // Predicated region
  $region14: #{agent_forward.1} parent=0 // pred_check
    _
  $region15: #{agent_forward.1} parent=0 // pred_check_branch
    %19 = sbr.rel (0) target = $region17
  $region16: #{agent_forward.1} parent=0 // pred_region
    _
  $region17: #{agent_forward.1} parent=0 // pred_fallthru
    _
  // Predicated region
  $region18: #{agent_forward.1} parent=0 // pred_check
    _
  $region19: #{agent_forward.1} parent=0 // pred_check_branch
    %21 = sbr.rel (0) target = $region21
  $region20: #{agent_forward.1} parent=0 // pred_region
    _
  $region21: #{agent_forward.1} parent=0 // pred_fallthru
    _
  // Predicated region
  $region22: #{agent_forward.1} parent=0 // pred_check
    _
  $region23: #{agent_forward.1} parent=0 // pred_check_branch
    %23 = sbr.rel (0) target = $region25
  $region24: #{agent_forward.1} parent=0 // pred_region
    _
  $region25: #{agent_forward.1} parent=0 // pred_fallthru
    _
  // Predicated region
  $region26: #{agent_forward.1} parent=0 // pred_check
    _
  $region27: #{agent_forward.1} parent=0 // pred_check_branch
    %25 = sbr.rel (0) target = $region29
  $region28: #{agent_forward.1} parent=0 // pred_region
    _
  $region29: #{agent_forward.1} parent=0 // pred_fallthru
    _
  %v26 = vld [vmem:[%s0] sm:$0xff]
  %v27 = vld [vmem:[%s0 + $0x8] sm:$0xff]
  %v28 = vld [vmem:[%s1] sm:$0xff]
  %v29 = vld [vmem:[%s1 + $0x8] sm:$0xff]
  %v30 = vld [vmem:[%s1 + $0x10] sm:$0xff]
  %v31 = vld [vmem:[%s1 + $0x18] sm:$0xff]
  %v32 = vld [vmem:[%s2] sm:$0xff]
  %v33 = vld [vmem:[%s2 + $0x8] sm:$0xff]
  %v34 = vld [vmem:[%s2 + $0x10] sm:$0xff]
  %v35 = vld [vmem:[%s2 + $0x18] sm:$0xff]
  %37 = vset.pattern.permute.xlu0 0
  %38 = vperm.xlu0 %37, %v32
  %v39 = vpop.permute.xlu0 %38
  %42 = vset.pattern.permute.xlu0 0
  %43 = vperm.xlu0 %42, %v33
  %v44 = vpop.permute.xlu0 %43
  %47 = vset.pattern.permute.xlu0 0
  %48 = vperm.xlu0 %47, %v34
  %v49 = vpop.permute.xlu0 %48
  %52 = vset.pattern.permute.xlu0 0
  %53 = vperm.xlu0 %52, %v35
  %v54 = vpop.permute.xlu0 %53
  %vm56 = vcmask 130048
  %v58 = vsel %vm56, %v28, 0
  %v61 = vsel %vm56, %v29, 0
  %v64 = vsel %vm56, %v30, 0
  %v67 = vsel %vm56, %v31, 0
  %69 = vmatprep.subr.mxu0 0.0
  %70 = vmatpush1.msra.mxu0 %v26
  %71 = vmatprep.subr.mxu0 0.0
  %72 = vmatpush1.msra.mxu0 %v27
  %73 = vmatprep.subr.mxu0 0.0
  %74 = vmatpush1.msra.mxu0 0.0
  %75 = vmatprep.subr.mxu0 0.0
  %76 = vmatpush1.msra.mxu0 0.0
  %77 = vmatprep.subr.mxu0 0.0
  %78 = vmatpush1.msra.mxu0 0.0
  %79 = vmatprep.subr.mxu0 0.0
  %80 = vmatpush1.msra.mxu0 0.0
  %81 = vmatprep.subr.mxu0 0.0
  %82 = vmatpush1.msra.mxu0 0.0
  %83 = vmatprep.subr.mxu0 0.0
  %84 = vmatpush1.msra.mxu0 0.0
  %85 = vmatprep.subr.mxu0 0.0
  %86 = vmatpush1.msra.mxu0 0.0
  %87 = vmatprep.subr.mxu0 0.0
  %88 = vmatpush1.msra.mxu0 0.0
  %89 = vmatprep.subr.mxu0 0.0
  %90 = vmatpush1.msra.mxu0 0.0
  %91 = vmatprep.subr.mxu0 0.0
  %92 = vmatpush1.msra.mxu0 0.0
  %93 = vmatprep.subr.mxu0 0.0
  %94 = vmatpush1.msra.mxu0 0.0
  %95 = vmatprep.subr.mxu0 0.0
  %96 = vmatpush1.msra.mxu0 0.0
  %97 = vmatprep.subr.mxu0 0.0
  %98 = vmatpush1.msra.mxu0 0.0
  %99 = vmatprep.subr.mxu0 0.0
  %100 = vmatpush1.msra.mxu0 0.0
  %101 = vmatprep.subr.mxu0 0.0
  %102 = vmatpush1.msra.mxu0 0.0
  %103 = vmatprep.subr.mxu0 0.0
  %104 = vmatpush1.msra.mxu0 0.0
  %105 = vmatprep.subr.mxu0 0.0
  %106 = vmatpush1.msra.mxu0 0.0
  %107 = vmatprep.subr.mxu0 0.0
  %108 = vmatpush1.msra.mxu0 0.0
  %109 = vmatprep.subr.mxu0 0.0
  %110 = vmatpush1.msra.mxu0 0.0
  %111 = vmatprep.subr.mxu0 0.0
  %112 = vmatpush1.msra.mxu0 0.0
  %113 = vmatprep.subr.mxu0 0.0
  %114 = vmatpush1.msra.mxu0 0.0
  %115 = vmatprep.subr.mxu0 0.0
  %116 = vmatpush1.msra.mxu0 0.0
  %117 = vmatprep.subr.mxu0 0.0
  %118 = vmatpush1.msra.mxu0 0.0
  %119 = vmatprep.subr.mxu0 0.0
  %120 = vmatpush1.msra.mxu0 0.0
  %121 = vmatprep.subr.mxu0 0.0
  %122 = vmatpush1.msra.mxu0 0.0
  %123 = vmatprep.subr.mxu0 0.0
  %124 = vmatpush1.msra.mxu0 0.0
  %125 = vmatprep.subr.mxu0 0.0
  %126 = vmatpush1.msra.mxu0 0.0
  %127 = vmatprep.subr.mxu0 0.0
  %128 = vmatpush1.msra.mxu0 0.0
  %129 = vmatprep.subr.mxu0 0.0
  %130 = vmatpush1.msra.mxu0 0.0
  %131 = vmatprep.subr.mxu0 0.0
  %132 = vmatpush1.msra.mxu0 0.0
  %133 = vmatprep.mubr.f32.mxu0 0.0
  %134 = vmatmul.mubr.f32.gmra.mrb[0].mxu0 %v58
  %v135 = vpop.f32.mrb[0].mxu0
  %v136 = vadd.f32 %v39, %v135
  %v137 = vpop.f32.mrb[0].mxu0
  %138 = vmatprep.mubr.f32.mxu0 0.0
  %139 = vmatmul.mubr.f32.gmra.mrb[0].mxu0 %v61
  %v140 = vpop.f32.mrb[0].mxu0
  %v141 = vadd.f32 %v44, %v140
  %v142 = vpop.f32.mrb[0].mxu0
  %143 = vmatprep.mubr.f32.mxu0 0.0
  %144 = vmatmul.mubr.f32.gmra.mrb[0].mxu0 %v64
  %v145 = vpop.f32.mrb[0].mxu0
  %v146 = vadd.f32 %v49, %v145
  %v147 = vpop.f32.mrb[0].mxu0
  %148 = vmatprep.mubr.f32.mxu0 0.0
  %149 = vmatmul.mubr.f32.gmra.mrb[0].mxu0 %v67
  %v150 = vpop.f32.mrb[0].mxu0
  %v151 = vadd.f32 %v54, %v150
  %v152 = vpop.f32.mrb[0].mxu0
  %153 = vdwg.mxu0
  %v154 = vmax.f32 %v136, 0.0
  %v155 = vmax.f32 %v141, 0.0
  %v156 = vmax.f32 %v146, 0.0
  %v157 = vmax.f32 %v151, 0.0
  %v158 = vld [vmem:[%s3] sm:$0xff]
  %v159 = vld [vmem:[%s3 + $0x8] sm:$0xff]
  %v160 = vld [vmem:[%s3 + $0x10] sm:$0xff]
  %v161 = vld [vmem:[%s3 + $0x18] sm:$0xff]
  %v162 = vld [vmem:[%s4] sm:$0xff]
  %v163 = vld [vmem:[%s4 + $0x8] sm:$0xff]
  %v164 = vld [vmem:[%s4 + $0x10] sm:$0xff]
  %v165 = vld [vmem:[%s4 + $0x18] sm:$0xff]
  %167 = vset.pattern.permute.xlu0 0
  %168 = vperm.xlu0 %167, %v162
  %v169 = vpop.permute.xlu0 %168
  %172 = vset.pattern.permute.xlu0 0
  %173 = vperm.xlu0 %172, %v163
  %v174 = vpop.permute.xlu0 %173
  %177 = vset.pattern.permute.xlu0 0
  %178 = vperm.xlu0 %177, %v164
  %v179 = vpop.permute.xlu0 %178
  %182 = vset.pattern.permute.xlu0 0
  %183 = vperm.xlu0 %182, %v165
  %v184 = vpop.permute.xlu0 %183
  %vm186 = vcmask 261120
  %v188 = vsel %vm186, %v158, 0
  %v191 = vsel %vm186, %v159, 0
  %v194 = vsel %vm186, %v160, 0
  %v197 = vsel %vm186, %v161, 0
  %199 = vmatprep.subr.mxu0 0.0
  %200 = vmatpush1.msra.mxu0 %v154
  %201 = vmatprep.subr.mxu0 0.0
  %202 = vmatpush1.msra.mxu0 %v155
  %203 = vmatprep.subr.mxu0 0.0
  %204 = vmatpush1.msra.mxu0 %v156
  %205 = vmatprep.subr.mxu0 0.0
  %206 = vmatpush1.msra.mxu0 %v157
  %207 = vmatprep.subr.mxu0 0.0
  %208 = vmatpush1.msra.mxu0 0.0
  %209 = vmatprep.subr.mxu0 0.0
  %210 = vmatpush1.msra.mxu0 0.0
  %211 = vmatprep.subr.mxu0 0.0
  %212 = vmatpush1.msra.mxu0 0.0
  %213 = vmatprep.subr.mxu0 0.0
  %214 = vmatpush1.msra.mxu0 0.0
  %215 = vmatprep.subr.mxu0 0.0
  %216 = vmatpush1.msra.mxu0 0.0
  %217 = vmatprep.subr.mxu0 0.0
  %218 = vmatpush1.msra.mxu0 0.0
  %219 = vmatprep.subr.mxu0 0.0
  %220 = vmatpush1.msra.mxu0 0.0
  %221 = vmatprep.subr.mxu0 0.0
  %222 = vmatpush1.msra.mxu0 0.0
  %223 = vmatprep.subr.mxu0 0.0
  %224 = vmatpush1.msra.mxu0 0.0
  %225 = vmatprep.subr.mxu0 0.0
  %226 = vmatpush1.msra.mxu0 0.0
  %227 = vmatprep.subr.mxu0 0.0
  %228 = vmatpush1.msra.mxu0 0.0
  %229 = vmatprep.subr.mxu0 0.0
  %230 = vmatpush1.msra.mxu0 0.0
  %231 = vmatprep.subr.mxu0 0.0
  %232 = vmatpush1.msra.mxu0 0.0
  %233 = vmatprep.subr.mxu0 0.0
  %234 = vmatpush1.msra.mxu0 0.0
  %235 = vmatprep.subr.mxu0 0.0
  %236 = vmatpush1.msra.mxu0 0.0
  %237 = vmatprep.subr.mxu0 0.0
  %238 = vmatpush1.msra.mxu0 0.0
  %239 = vmatprep.subr.mxu0 0.0
  %240 = vmatpush1.msra.mxu0 0.0
  %241 = vmatprep.subr.mxu0 0.0
  %242 = vmatpush1.msra.mxu0 0.0
  %243 = vmatprep.subr.mxu0 0.0
  %244 = vmatpush1.msra.mxu0 0.0
  %245 = vmatprep.subr.mxu0 0.0
  %246 = vmatpush1.msra.mxu0 0.0
  %247 = vmatprep.subr.mxu0 0.0
  %248 = vmatpush1.msra.mxu0 0.0
  %249 = vmatprep.subr.mxu0 0.0
  %250 = vmatpush1.msra.mxu0 0.0
  %251 = vmatprep.subr.mxu0 0.0
  %252 = vmatpush1.msra.mxu0 0.0
  %253 = vmatprep.subr.mxu0 0.0
  %254 = vmatpush1.msra.mxu0 0.0
  %255 = vmatprep.subr.mxu0 0.0
  %256 = vmatpush1.msra.mxu0 0.0
  %257 = vmatprep.subr.mxu0 0.0
  %258 = vmatpush1.msra.mxu0 0.0
  %259 = vmatprep.subr.mxu0 0.0
  %260 = vmatpush1.msra.mxu0 0.0
  %261 = vmatprep.subr.mxu0 0.0
  %262 = vmatpush1.msra.mxu0 0.0
  %263 = vmatprep.mubr.f32.mxu0 0.0
  %264 = vmatmul.mubr.f32.gmra.mrb[0].mxu0 %v188
  %v265 = vpop.f32.mrb[0].mxu0
  %v266 = vadd.f32 %v169, %v265
  %v267 = vpop.f32.mrb[0].mxu0
  %268 = vmatprep.mubr.f32.mxu0 0.0
  %269 = vmatmul.mubr.f32.gmra.mrb[0].mxu0 %v191
  %v270 = vpop.f32.mrb[0].mxu0
  %v271 = vadd.f32 %v174, %v270
  %v272 = vpop.f32.mrb[0].mxu0
  %273 = vmatprep.mubr.f32.mxu0 0.0
  %274 = vmatmul.mubr.f32.gmra.mrb[0].mxu0 %v194
  %v275 = vpop.f32.mrb[0].mxu0
  %v276 = vadd.f32 %v179, %v275
  %v277 = vpop.f32.mrb[0].mxu0
  %278 = vmatprep.mubr.f32.mxu0 0.0
  %279 = vmatmul.mubr.f32.gmra.mrb[0].mxu0 %v197
  %v280 = vpop.f32.mrb[0].mxu0
  %v281 = vadd.f32 %v184, %v280
  %v282 = vpop.f32.mrb[0].mxu0
  %283 = vdwg.mxu0
  %v284 = vmax.f32 %v266, 0.0
  %v285 = vmax.f32 %v271, 0.0
  %v286 = vmax.f32 %v276, 0.0
  %v287 = vmax.f32 %v281, 0.0
  %v288 = vld [vmem:[%s5] sm:$0xf]
  %v289 = vld [vmem:[%s6] sm:$0xf]
  %291 = vset.pattern.permute.xlu0 0
  %292 = vperm.xlu0 %291, %v289
  %v293 = vpop.permute.xlu0 %292
  %v296 = vsel %vm186, %v288, 0
  %298 = vmatprep.subr.mxu0 0.0
  %299 = vmatpush1.msra.mxu0 %v284
  %300 = vmatprep.subr.mxu0 0.0
  %301 = vmatpush1.msra.mxu0 %v285
  %302 = vmatprep.subr.mxu0 0.0
  %303 = vmatpush1.msra.mxu0 %v286
  %304 = vmatprep.subr.mxu0 0.0
  %305 = vmatpush1.msra.mxu0 %v287
  %306 = vmatprep.subr.mxu0 0.0
  %307 = vmatpush1.msra.mxu0 0.0
  %308 = vmatprep.subr.mxu0 0.0
  %309 = vmatpush1.msra.mxu0 0.0
  %310 = vmatprep.subr.mxu0 0.0
  %311 = vmatpush1.msra.mxu0 0.0
  %312 = vmatprep.subr.mxu0 0.0
  %313 = vmatpush1.msra.mxu0 0.0
  %314 = vmatprep.subr.mxu0 0.0
  %315 = vmatpush1.msra.mxu0 0.0
  %316 = vmatprep.subr.mxu0 0.0
  %317 = vmatpush1.msra.mxu0 0.0
  %318 = vmatprep.subr.mxu0 0.0
  %319 = vmatpush1.msra.mxu0 0.0
  %320 = vmatprep.subr.mxu0 0.0
  %321 = vmatpush1.msra.mxu0 0.0
  %322 = vmatprep.subr.mxu0 0.0
  %323 = vmatpush1.msra.mxu0 0.0
  %324 = vmatprep.subr.mxu0 0.0
  %325 = vmatpush1.msra.mxu0 0.0
  %326 = vmatprep.subr.mxu0 0.0
  %327 = vmatpush1.msra.mxu0 0.0
  %328 = vmatprep.subr.mxu0 0.0
  %329 = vmatpush1.msra.mxu0 0.0
  %330 = vmatprep.subr.mxu0 0.0
  %331 = vmatpush1.msra.mxu0 0.0
  %332 = vmatprep.subr.mxu0 0.0
  %333 = vmatpush1.msra.mxu0 0.0
  %334 = vmatprep.subr.mxu0 0.0
  %335 = vmatpush1.msra.mxu0 0.0
  %336 = vmatprep.subr.mxu0 0.0
  %337 = vmatpush1.msra.mxu0 0.0
  %338 = vmatprep.subr.mxu0 0.0
  %339 = vmatpush1.msra.mxu0 0.0
  %340 = vmatprep.subr.mxu0 0.0
  %341 = vmatpush1.msra.mxu0 0.0
  %342 = vmatprep.subr.mxu0 0.0
  %343 = vmatpush1.msra.mxu0 0.0
  %344 = vmatprep.subr.mxu0 0.0
  %345 = vmatpush1.msra.mxu0 0.0
  %346 = vmatprep.subr.mxu0 0.0
  %347 = vmatpush1.msra.mxu0 0.0
  %348 = vmatprep.subr.mxu0 0.0
  %349 = vmatpush1.msra.mxu0 0.0
  %350 = vmatprep.subr.mxu0 0.0
  %351 = vmatpush1.msra.mxu0 0.0
  %352 = vmatprep.subr.mxu0 0.0
  %353 = vmatpush1.msra.mxu0 0.0
  %354 = vmatprep.subr.mxu0 0.0
  %355 = vmatpush1.msra.mxu0 0.0
  %356 = vmatprep.subr.mxu0 0.0
  %357 = vmatpush1.msra.mxu0 0.0
  %358 = vmatprep.subr.mxu0 0.0
  %359 = vmatpush1.msra.mxu0 0.0
  %360 = vmatprep.subr.mxu0 0.0
  %361 = vmatpush1.msra.mxu0 0.0
  %362 = vmatprep.mubr.f32.mxu0 0.0
  %363 = vmatmul.mubr.f32.gmra.mrb[0].mxu0 %v296
  %v364 = vpop.f32.mrb[0].mxu0
  %v365 = vadd.f32 %v293, %v364
  %v366 = vpop.f32.mrb[0].mxu0
  %367 = vdwg.mxu0
  %368 = vst [vmem:[%s7] sm:$0xf] %v365
  // Predicated region
  $region30: #{agent_forward.1} parent=0 // pred_check
    _
  $region31: #{agent_forward.1} parent=0 // pred_check_branch
    %370 = sbr.rel (0) target = $region33
  $region32: #{agent_forward.1} parent=0 // pred_region
    _
  $region33: #{agent_forward.1} parent=0 // pred_fallthru
    _
  // Predicated region
  $region34: #{agent_forward.1} parent=0 // pred_check
    _
  $region35: #{agent_forward.1} parent=0 // pred_check_branch
    %372 = sbr.rel (0) target = $region37
  $region36: #{agent_forward.1} parent=0 // pred_region
    _
  $region37: #{agent_forward.1} parent=0 // pred_fallthru
    _

</llo_original>
